<compile_context>
chip_gen: v7x
topology: tpu7x:2x2x1
jax: 0.10.0
libtpu: 0.0.40
codegen_flags: <defaults>
</compile_context>

<pallas_src>
import functools

import jax
import jax.numpy as jnp
from jax.experimental import pallas as pl
from jax.experimental.pallas import tpu as pltpu


def _sobel_partial_kernel(x_ref, out_ref, *, width, groups, threshold):
    """One image per grid step.

    x_ref:   (1, C, R, L) block with L = groups * width, R = H // groups.
             Element [0, c, r, g*width + j] is pixel (r*groups + g, j) of
             channel c (lane-dense row-major packing; groups == 1 is the plain
             (H, W) layout).
    out_ref: (1, 2, L) per-image, per-lane partials:
             row 0 = sum of sobel**2 where sobel**2 < threshold,
             row 1 = count of elements where sobel**2 < threshold.
    """
    _, _, R, L = x_ref.shape

    # Channel sum in f32 (cast happens in VMEM; HBM carried the source dtype).
    s = jnp.sum(x_ref[0].astype(jnp.float32), axis=0)                  # (R, L)

    lane = jax.lax.broadcasted_iota(jnp.int32, (R, L), 1)
    # Column index inside the original image row. `width` is a power of two
    # whenever groups > 1, so no integer modulo is needed.
    jcol = (lane & (width - 1)) if groups > 1 else lane

    def roll_lanes(x, k):
        return pltpu.roll(x, shift=k, axis=1)

    def shift_rows(x, d):
        # d=+1: out[r] = x[r-1] (zero top) ; d=-1: out[r] = x[r+1] (zero bottom)
        if x.shape[0] == 1:
            return jnp.zeros_like(x)
        z = jnp.zeros((1, x.shape[1]), x.dtype)
        if d > 0:
            return jnp.concatenate([z, x[:-1, :]], axis=0)
        return jnp.concatenate([x[1:, :], z], axis=0)

    def up(p):
        # up[r, g*W + j] = s_ext[r*G + g - 1, j]   (zero above the image)
        a = roll_lanes(p, width) if groups > 1 else p
        b = shift_rows(a, +1)
        return jnp.where(lane >= width, a, b) if groups > 1 else b

    def down(p):
        # down[r, g*W + j] = s_ext[r*G + g + 1, j] (zero below the image)
        a = roll_lanes(p, L - width) if groups > 1 else p
        b = shift_rows(a, -1)
        return jnp.where(lane < L - width, a, b) if groups > 1 else b

    def left_nb(v):
        # v_ext[i, j - 1]  (zero left of the image; image/pad boundaries
        # coincide with the width-blocks, so only a lane roll + mask is needed)
        return jnp.where(jcol == 0, 0.0, roll_lanes(v, 1))

    def right_nb(v):
        # v_ext[i, j + 1]  (zero right of the image)
        return jnp.where(jcol == width - 1, 0.0, roll_lanes(v, L - 1))

    u, d = up(s), down(s)
    # Separable Sobel taps:
    #   Kx = [[1,0,-1],[2,0,-2],[1,0,-1]] -> vertical smooth, horizontal diff
    #   Ky = [[1,2,1],[0,0,0],[-1,-2,-1]] -> vertical diff,   horizontal smooth
    v1 = u + 2.0 * s + d
    v2 = u - d
    gx = left_nb(v1) - right_nb(v1)
    gy = left_nb(v2) + 2.0 * v2 + right_nb(v2)

    sob = gx * gx + gy * gy                                            # sx^2 + sy^2
    mask = sob < threshold

    # Per-lane partials: sublane reduction only (keeps the XLU free for the
    # rolls); the 128-lane reduction + divide run in the plain-JAX epilogue.
    psum = jnp.sum(jnp.where(mask, sob, 0.0), axis=0, keepdims=True)   # (1, L)
    pcnt = jnp.sum(mask.astype(jnp.float32), axis=0, keepdims=True)    # (1, L)
    out_ref[0] = jnp.concatenate([psum, pcnt], axis=0)                 # (2, L)


def _packing_groups(H: int, W: int) -> int:
    """Image rows folded into the lane dim so each vreg row carries 128 px."""
    if W >= 128 or (128 % W) != 0:
        return 1
    g = 128 // W                      # W divides 128 -> W, g are powers of two
    while g > 1 and (H % g) != 0:
        g //= 2
    return g


def sobel_regularization(pred_depth: jax.Array, threshold: float = 1.0) -> jax.Array:
    """pred_depth: (N, C, H, W), float dtype (f32/bf16). Returns scalar f32."""
    N, C, H, W = pred_depth.shape

    G = _packing_groups(H, W)
    R, L = H // G, G * W
    # Lane-dense repack: a free row-major reshape, element (r, g*W + j) is
    # pixel (r*G + g, j).
    x = pred_depth.reshape(N, C, R, L)

    kernel = functools.partial(
        _sobel_partial_kernel, width=W, groups=G, threshold=float(threshold))

    # VMEM: only the input block is double-buffered; the stencil needs roughly
    # a dozen (R, L) f32 temporaries plus a tiny per-image output tile.
    in_block = C * R * L * pred_depth.dtype.itemsize
    temps = 14 * R * L * 4 + 4 * 2 * L * 4
    try:
        hw_cap = int(pltpu.get_tpu_info().vmem_capacity_bytes)
    except Exception:                         # older runtimes: assume v7x floor
        hw_cap = 64 << 20
    vmem_limit = int(min(max(2 * in_block + temps + (4 << 20), 16 << 20), hw_cap))

    parts = pl.pallas_call(
        kernel,
        out_shape=jax.ShapeDtypeStruct((N, 2, L), jnp.float32),
        grid_spec=pltpu.PrefetchScalarGridSpec(
            num_scalar_prefetch=0,
            grid=(N,),
            in_specs=[pl.BlockSpec((1, C, R, L), lambda n: (n, 0, 0, 0))],
            out_specs=pl.BlockSpec((1, 2, L), lambda n: (n, 0, 0)),
        ),
        compiler_params=pltpu.CompilerParams(
            dimension_semantics=("parallel",),   # independent per-image partials
            vmem_limit_bytes=vmem_limit,
        ),
    )(x)

    total_sum = jnp.sum(parts[:, 0, :])
    # Per-lane counts are exact small integers in f32; sum them in int32.
    total_cnt = jnp.sum(parts[:, 1, :].astype(jnp.int32))
    # Empty selection -> 0 / 0 -> NaN, matching torch's empty .mean().
    return total_sum / total_cnt.astype(jnp.float32)


def _reference(pred_depth: jax.Array, threshold: float = 1.0) -> jax.Array:
    # Pure-JAX reference (mirrors the PyTorch module) for verification.
    n = pred_depth.shape[1]
    kx = jnp.array([[1., 0., -1.], [2., 0., -2.], [1., 0., -1.]], jnp.float32)
    ky = jnp.array([[1., 2., 1.], [0., 0., 0.], [-1., -2., -1.]], jnp.float32)
    wx = jnp.broadcast_to(kx, (1, n, 3, 3))
    wy = jnp.broadcast_to(ky, (1, n, 3, 3))
    conv = functools.partial(
        jax.lax.conv_general_dilated,
        window_strides=(1, 1), padding=((1, 1), (1, 1)),
        dimension_numbers=("NCHW", "OIHW", "NCHW"),
        precision=jax.lax.Precision.HIGHEST)
    xf = pred_depth.astype(jnp.float32)
    sob = conv(xf, wx) ** 2 + conv(xf, wy) ** 2
    mask = sob < threshold
    return jnp.sum(jnp.where(mask, sob, 0.0)) / jnp.sum(mask.astype(jnp.float32))


if __name__ == "__main__":
    key = jax.random.PRNGKey(0)
    # Small scale so plenty of sobel responses fall below threshold=1.0.
    x = 0.1 * jax.random.normal(key, (2, 4, 16, 16), dtype=jnp.float32)

    out = jax.block_until_ready(sobel_regularization(x, threshold=1.0))
    ref = jax.block_until_ready(_reference(x, threshold=1.0))
    assert jnp.allclose(out, ref, rtol=1e-4, atol=1e-5), (out, ref)

    # Also exercise the unpacked (W >= 128) path.
    x2 = 0.1 * jax.random.normal(jax.random.PRNGKey(1), (1, 3, 16, 128),
                                 dtype=jnp.float32)
    out2 = jax.block_until_ready(sobel_regularization(x2, threshold=1.0))
    ref2 = jax.block_until_ready(_reference(x2, threshold=1.0))
    assert jnp.allclose(out2, ref2, rtol=1e-4, atol=1e-5), (out2, ref2)

    print("KERNEL_OK")
</pallas_src>

<mosaic_0001>
module attributes {stable_mosaic.version = 11 : i64} {
  func.func @_sobel_partial_kernel(%arg0: i32, %arg1: memref<1x4x2x128xf32, #tpu.memory_space<vmem>>, %arg2: memref<1x2x128xf32, #tpu.memory_space<vmem>>) attributes {dimension_semantics = [#tpu.dimension_semantics<parallel>], iteration_bounds = array<i64: 2>, scalar_prefetch = 0 : i64, scratch_operands = 0 : i64, tpu.core_type = #tpu.core_type<tc>, window_params = [{transform_indices = @transform_0, window_bounds = array<i64: 1, 4, 2, 128>}, {transform_indices = @transform_1, window_bounds = array<i64: 1, 2, 128>}]} {
    %c0 = arith.constant 0 : index
    %c0_0 = arith.constant 0 : index
    %c0_1 = arith.constant 0 : index
    %c0_2 = arith.constant 0 : index
    %0 = vector.load %arg1[%c0, %c0_0, %c0_1, %c0_2] : memref<1x4x2x128xf32, #tpu.memory_space<vmem>>, vector<1x4x2x128xf32>
    %1 = vector.shape_cast %0 : vector<1x4x2x128xf32> to vector<4x2x128xf32>
    %cst = arith.constant dense<0.000000e+00> : vector<2x128xf32>
    %2 = vector.multi_reduction <add>, %1, %cst [0] : vector<4x2x128xf32> to vector<2x128xf32>
    %3 = tpu.iota {dimensions = array<i32: 1>} : vector<2x128xi32>
    %c15_i32 = arith.constant 15 : i32
    %4 = vector.broadcast %c15_i32 : i32 to vector<2x128xi32>
    %5 = arith.andi %3, %4 : vector<2x128xi32>
    %c16_i32 = arith.constant 16 : i32
    %6 = tpu.dynamic_rotate %2 by %c16_i32 dim 1 : vector<2x128xf32>, i32 -> vector<2x128xf32>
    %cst_3 = arith.constant 0.000000e+00 : f32
    %7 = vector.broadcast %cst_3 : f32 to vector<1x128xf32>
    %8 = vector.extract_strided_slice %6 {offsets = [0, 0], sizes = [1, 128], strides = [1, 1]} : vector<2x128xf32> to vector<1x128xf32>
    %9 = tpu.concatenate %7, %8 in 0 : vector<1x128xf32>, vector<1x128xf32> -> vector<2x128xf32>
    %c16_i32_4 = arith.constant 16 : i32
    %10 = vector.broadcast %c16_i32_4 : i32 to vector<2x128xi32>
    %11 = arith.cmpi sge, %3, %10 : vector<2x128xi32>
    %12 = arith.select %11, %6, %9 : vector<2x128xi1>, vector<2x128xf32>
    %c112_i32 = arith.constant 112 : i32
    %13 = tpu.dynamic_rotate %2 by %c112_i32 dim 1 : vector<2x128xf32>, i32 -> vector<2x128xf32>
    %cst_5 = arith.constant 0.000000e+00 : f32
    %14 = vector.broadcast %cst_5 : f32 to vector<1x128xf32>
    %15 = vector.extract_strided_slice %13 {offsets = [1, 0], sizes = [1, 128], strides = [1, 1]} : vector<2x128xf32> to vector<1x128xf32>
    %16 = tpu.concatenate %15, %14 in 0 : vector<1x128xf32>, vector<1x128xf32> -> vector<2x128xf32>
    %c112_i32_6 = arith.constant 112 : i32
    %17 = vector.broadcast %c112_i32_6 : i32 to vector<2x128xi32>
    %18 = arith.cmpi slt, %3, %17 : vector<2x128xi32>
    %19 = arith.select %18, %13, %16 : vector<2x128xi1>, vector<2x128xf32>
    %cst_7 = arith.constant 2.000000e+00 : f32
    %20 = vector.broadcast %cst_7 : f32 to vector<2x128xf32>
    %21 = arith.mulf %20, %2 : vector<2x128xf32>
    %22 = arith.addf %12, %21 : vector<2x128xf32>
    %23 = arith.addf %22, %19 : vector<2x128xf32>
    %24 = arith.subf %12, %19 : vector<2x128xf32>
    %c0_i32 = arith.constant 0 : i32
    %25 = vector.broadcast %c0_i32 : i32 to vector<2x128xi32>
    %26 = arith.cmpi eq, %5, %25 : vector<2x128xi32>
    %c1_i32 = arith.constant 1 : i32
    %27 = tpu.dynamic_rotate %23 by %c1_i32 dim 1 : vector<2x128xf32>, i32 -> vector<2x128xf32>
    %cst_8 = arith.constant 0.000000e+00 : f32
    %28 = vector.broadcast %cst_8 : f32 to vector<2x128xf32>
    %29 = arith.select %26, %28, %27 : vector<2x128xi1>, vector<2x128xf32>
    %c15_i32_9 = arith.constant 15 : i32
    %30 = vector.broadcast %c15_i32_9 : i32 to vector<2x128xi32>
    %31 = arith.cmpi eq, %5, %30 : vector<2x128xi32>
    %c127_i32 = arith.constant 127 : i32
    %32 = tpu.dynamic_rotate %23 by %c127_i32 dim 1 : vector<2x128xf32>, i32 -> vector<2x128xf32>
    %cst_10 = arith.constant 0.000000e+00 : f32
    %33 = vector.broadcast %cst_10 : f32 to vector<2x128xf32>
    %34 = arith.select %31, %33, %32 : vector<2x128xi1>, vector<2x128xf32>
    %35 = arith.subf %29, %34 : vector<2x128xf32>
    %c0_i32_11 = arith.constant 0 : i32
    %36 = vector.broadcast %c0_i32_11 : i32 to vector<2x128xi32>
    %37 = arith.cmpi eq, %5, %36 : vector<2x128xi32>
    %c1_i32_12 = arith.constant 1 : i32
    %38 = tpu.dynamic_rotate %24 by %c1_i32_12 dim 1 : vector<2x128xf32>, i32 -> vector<2x128xf32>
    %cst_13 = arith.constant 0.000000e+00 : f32
    %39 = vector.broadcast %cst_13 : f32 to vector<2x128xf32>
    %40 = arith.select %37, %39, %38 : vector<2x128xi1>, vector<2x128xf32>
    %cst_14 = arith.constant 2.000000e+00 : f32
    %41 = vector.broadcast %cst_14 : f32 to vector<2x128xf32>
    %42 = arith.mulf %41, %24 : vector<2x128xf32>
    %43 = arith.addf %40, %42 : vector<2x128xf32>
    %c15_i32_15 = arith.constant 15 : i32
    %44 = vector.broadcast %c15_i32_15 : i32 to vector<2x128xi32>
    %45 = arith.cmpi eq, %5, %44 : vector<2x128xi32>
    %c127_i32_16 = arith.constant 127 : i32
    %46 = tpu.dynamic_rotate %24 by %c127_i32_16 dim 1 : vector<2x128xf32>, i32 -> vector<2x128xf32>
    %cst_17 = arith.constant 0.000000e+00 : f32
    %47 = vector.broadcast %cst_17 : f32 to vector<2x128xf32>
    %48 = arith.select %45, %47, %46 : vector<2x128xi1>, vector<2x128xf32>
    %49 = arith.addf %43, %48 : vector<2x128xf32>
    %50 = arith.mulf %35, %35 : vector<2x128xf32>
    %51 = arith.mulf %49, %49 : vector<2x128xf32>
    %52 = arith.addf %50, %51 : vector<2x128xf32>
    %cst_18 = arith.constant 1.000000e+00 : f32
    %53 = vector.broadcast %cst_18 : f32 to vector<2x128xf32>
    %54 = arith.cmpf olt, %52, %53 : vector<2x128xf32>
    %cst_19 = arith.constant 0.000000e+00 : f32
    %55 = vector.broadcast %cst_19 : f32 to vector<2x128xf32>
    %56 = arith.select %54, %52, %55 : vector<2x128xi1>, vector<2x128xf32>
    %cst_20 = arith.constant dense<0.000000e+00> : vector<128xf32>
    %57 = vector.multi_reduction <add>, %56, %cst_20 [0] : vector<2x128xf32> to vector<128xf32>
    %58 = vector.shape_cast %57 : vector<128xf32> to vector<1x128xf32>
    %59 = arith.extui %54 : vector<2x128xi1> to vector<2x128xi32>
    %60 = arith.sitofp %59 : vector<2x128xi32> to vector<2x128xf32>
    %cst_21 = arith.constant dense<0.000000e+00> : vector<128xf32>
    %61 = vector.multi_reduction <add>, %60, %cst_21 [0] : vector<2x128xf32> to vector<128xf32>
    %62 = vector.shape_cast %61 : vector<128xf32> to vector<1x128xf32>
    %63 = tpu.concatenate %58, %62 in 0 : vector<1x128xf32>, vector<1x128xf32> -> vector<2x128xf32>
    %c0_22 = arith.constant 0 : index
    %c0_23 = arith.constant 0 : index
    %c0_24 = arith.constant 0 : index
    %64 = vector.load %arg2[%c0_22, %c0_23, %c0_24] : memref<1x2x128xf32, #tpu.memory_space<vmem>>, vector<1x2x128xf32>
    %65 = vector.shape_cast %64 : vector<1x2x128xf32> to vector<2x128xf32>
    %66 = vector.shape_cast %63 : vector<2x128xf32> to vector<1x2x128xf32>
    tpu.vector_store %arg2[%c0_22, %c0_23, %c0_24], %66 {strides = array<i32>} : memref<1x2x128xf32, #tpu.memory_space<vmem>>, vector<1x2x128xf32>,
    return
  }
  func.func @transform_0(%arg0: i32) -> (i32, i32, i32, i32) {
    %c0_i32 = arith.constant 0 : i32
    %c0_i32_0 = arith.constant 0 : i32
    %c0_i32_1 = arith.constant 0 : i32
    %c0_i32_2 = arith.constant 0 : i32
    return %arg0, %c0_i32, %c0_i32_0, %c0_i32_1 : i32, i32, i32, i32
  }
  func.func @transform_1(%arg0: i32) -> (i32, i32, i32) {
    %c0_i32 = arith.constant 0 : i32
    %c0_i32_0 = arith.constant 0 : i32
    %c0_i32_1 = arith.constant 0 : i32
    return %arg0, %c0_i32, %c0_i32_0 : i32, i32, i32
  }
}

</mosaic_0001>

<llo_original>
// kernel: tpu_custom_call.1
$region0: #{tpu_custom_call.1}
  #allocation0 [shape = 'u32[]', space=smem, size = 0x4, offset = 0x4, fixed_abs, tag = 'smem constant byte address 0x4 - core index']
  #allocation1 [shape = 'u32[144,128]{1,0:T(1,128)}', space=vmem, size = 0x12000, scoped, tag = 'internal scratch']
  %s0 = inlined_call_operand.hbm [shape: f32[2,4,2,128], index: 0, kind: input, shape index: {}]
  %s1 = inlined_call_operand.hbm [shape: f32[2,2,128], index: 1, kind: output, shape index: {}]
  %s2 = sld [smem:[#allocation0]]
  $region41: #{tpu_custom_call.1} parent=0
    _
  %s4 = ssub.s32 1, %s2
  %s5 = scalar_select 0, %s4, %s2
  $region1: #{tpu_custom_call.1} parent=0
    #allocation2 [shape = 'u8[8192]{0}', space=vmem, size = 0x2000, scoped, tag = 'input window, operand 0']
    #allocation3 [shape = 's32[2]{0}', space=sflag, size = 0x8, scoped, tag = 'scoped memory for tpu_custom_call.1']
    #allocation4 [shape = 's32[2]{0}', space=sflag, size = 0x8, scoped, tag = 'scoped memory for tpu_custom_call.1']
    #allocation5 [shape = 'u8[2048]{0}', space=vmem, size = 0x800, scoped, tag = 'output window, operand 0']
    %6 = vsyncpa [#allocation3], 0
    %s7 = scalar_lea.sflag [#allocation3], 1
    %8 = vsyncpa %s7, 0
    %9 = vsyncpa [#allocation4], 0
    %s10 = scalar_lea.sflag [#allocation4], 1
    %11 = vsyncpa %s10, 0
    loop: start=0, step=1, limit=4
    $region2: #{tpu_custom_call.1} parent=1 // loop_pre_header
      _
    $region3: #{tpu_custom_call.1} parent=1 // loop_header
      %s13 = sphi 0, %s17
      %p14 = scmp.ge.s32.totalorder %s13, 4
      %s23 = sphi 0, %s25
      %s26 = sphi 0, %s23
      %s27 = sphi 0, %s26
      %s43 = sphi 0, %s27
      %s49 = sphi 0, %s51
      %s52 = sphi 0, %s49
      %s53 = sphi 0, %s52
      %s69 = sphi 0, %s53
    $region4: #{tpu_custom_call.1} parent=1 // loop_header_branch
      %16 = sbr.rel (%p14) target = $region8
    $region5: #{tpu_custom_call.1} parent=1 // loop_body
      %s18 = ssub.s32 %s13, 1
      %s19 = ssub.s32 %s13, 2
      %s20 = sadd.s32 %s13, 1
      %s21 = ssub.s32 %s13, %s20
      %p22 = scmp.eq.s32.totalorder %s21, 0
      %s24 = sadd.s32 %s23, 1
      %s25 = scalar_select %p22, %s23, %s24
      %p28 = pneg %p22
      %p29 = scmp.eq.s32.totalorder %s13, 1
      %p30 = por %p28, %p29
      %p31 = scmp.ne.s32.totalorder %s23, %s26
      %p32 = scmp.eq.s32.totalorder %s13, 0
      %p33 = por %p31, %p32
      %p34 = scmp.ne.s32.totalorder %s23, %s26
      %p35 = scmp.eq.s32.totalorder %s18, 1
      %p36 = por %p34, %p35
      %p37 = scmp.ne.s32.totalorder %s26, %s27
      %p38 = scmp.eq.s32.totalorder %s18, 0
      %p39 = por %p37, %p38
      %p40 = scmp.ne.s32.totalorder %s26, %s27
      %p41 = scmp.eq.s32.totalorder %s19, 1
      %p42 = por %p40, %p41
      %p44 = scmp.ne.s32.totalorder %s27, %s43
      %p45 = scmp.eq.s32.totalorder %s19, 0
      %p46 = por %p44, %p45
      %s47 = ssub.s32 %s13, %s20
      %p48 = scmp.eq.s32.totalorder %s47, 0
      %s50 = sadd.s32 %s49, 1
      %s51 = scalar_select %p48, %s49, %s50
      %p54 = pneg %p48
      %p55 = scmp.eq.s32.totalorder %s13, 1
      %p56 = por %p54, %p55
      %p57 = scmp.ne.s32.totalorder %s49, %s52
      %p58 = scmp.eq.s32.totalorder %s13, 0
      %p59 = por %p57, %p58
      %p60 = scmp.ne.s32.totalorder %s49, %s52
      %p61 = scmp.eq.s32.totalorder %s18, 1
      %p62 = por %p60, %p61
      %p63 = scmp.ne.s32.totalorder %s52, %s53
      %p64 = scmp.eq.s32.totalorder %s18, 0
      %p65 = por %p63, %p64
      %p66 = scmp.ne.s32.totalorder %s52, %s53
      %p67 = scmp.eq.s32.totalorder %s19, 1
      %p68 = por %p66, %p67
      %p70 = scmp.ne.s32.totalorder %s53, %s69
      %p71 = scmp.eq.s32.totalorder %s19, 0
      %p72 = por %p70, %p71
      %p73 = scmp.le.s32.totalorder 1, %s13
      %p74 = scmp.lt.s32.totalorder %s13, 3
      %p75 = pnand %p73, %p74
      %p76 = pneg %p75
      // Predicated region
      $region9: #{tpu_custom_call.1} parent=5 // pred_check
        _
      $region10: #{tpu_custom_call.1} parent=5 // pred_check_branch
        %78 = sbr.rel (%p75) target = $region12
      $region11: #{tpu_custom_call.1} parent=5 // pred_region
        %s79 = ssub.s32 %s13, 1
      $region12: #{tpu_custom_call.1} parent=5 // pred_fallthru
        _
      %p80 = scmp.lt.s32.totalorder %s13, 2
      // Predicated region
      $region13: #{tpu_custom_call.1} parent=5 // pred_check
        %p81 = pneg %p80
      $region14: #{tpu_custom_call.1} parent=5 // pred_check_branch
        %83 = sbr.rel (%p81) target = $region16
      $region15: #{tpu_custom_call.1} parent=5 // pred_region
        // Predicated region
        $region17: #{tpu_custom_call.1} parent=15 // pred_check
          %p84 = pneg %p33
        $region18: #{tpu_custom_call.1} parent=15 // pred_check_branch
          %86 = sbr.rel (%p84) target = $region20
        $region19: #{tpu_custom_call.1} parent=15 // pred_region
          %s87 = sand.u32 %s23, 1
          %s88 = scalar_lea.sflag [#allocation3], %s87
          %s89 = sand.u32 %s23, 1
          %s90 = smul.addr %s89, 8
          %s91 = scalar_lea.vmem [#allocation2], %s90
          %s93 = ssub.s32 128, 128
          %94 = vsyncadd %s88, %s93
          %s95 = smul.addr %s13, 4
          %s96 = smul.addr %s95, 32
          %s97 = scalar_lea.hbm %s0, %s96
          %s98 = sshll.u32 %s91, 4
          %s99 = int_to_ptr.vmem [resolvable:$true] %s98
          %104 = dma.hbm_to_vmem [thread:$0]  %s97, 128, %s99, %s88, 32, 32, 2
        $region20: #{tpu_custom_call.1} parent=15 // pred_fallthru
          _
      $region16: #{tpu_custom_call.1} parent=5 // pred_fallthru
        _
      %p105 = scmp.le.s32.totalorder 1, %s13
      %p106 = scmp.lt.s32.totalorder %s13, 3
      %p107 = pnand %p105, %p106
      %p108 = pneg %p107
      // Predicated region
      $region21: #{tpu_custom_call.1} parent=5 // pred_check
        _
      $region22: #{tpu_custom_call.1} parent=5 // pred_check_branch
        %110 = sbr.rel (%p107) target = $region24
      $region23: #{tpu_custom_call.1} parent=5 // pred_region
        %s111 = ssub.s32 %s13, 1
        %s112 = sand.u32 %s26, 1
        %s113 = scalar_lea.sflag [#allocation3], %s112
        %s114 = sand.u32 %s26, 1
        %s115 = smul.addr %s114, 8
        %s116 = scalar_lea.vmem [#allocation2], %s115
        // Predicated region
        $region25: #{tpu_custom_call.1} parent=23 // pred_check
          %p117 = pneg %p39
        $region26: #{tpu_custom_call.1} parent=23 // pred_check_branch
          %119 = sbr.rel (%p117) target = $region28
        $region27: #{tpu_custom_call.1} parent=23 // pred_region
          %120 = dma.done %s113, 128
        $region28: #{tpu_custom_call.1} parent=23 // pred_fallthru
          _
        %s121 = sand.u32 %s26, 1
        %s122 = scalar_lea.sflag [#allocation3], %s121
        %s123 = sand.u32 %s26, 1
        %s124 = smul.addr %s123, 8
        %s125 = scalar_lea.vmem [#allocation2], %s124
        %p126 = pneg %p39
        %p127 = pneg %p36
        %p128 = pneg %p65
        %p129 = pneg %p62
        %s130 = sand.u32 %s52, 1
        %s131 = scalar_lea.sflag [#allocation4], %s130
        %s132 = sand.u32 %s52, 1
        %s133 = smul.addr %s132, 2
        %s134 = scalar_lea.vmem [#allocation5], %s133
        %v135 = vld [vmem:[%s116] sm:$0x3]
        %v136 = vld [vmem:[%s116 + $0x2] sm:$0x3]
        %v137 = vld [vmem:[%s116 + $0x4] sm:$0x3]
        %v138 = vld [vmem:[%s116 + $0x6] sm:$0x3]
        %vm139 = vcmask 1041408
        %v140 = vsel %vm139, %v135, 0.0
        %v141 = vsel %vm139, %v136, 0.0
        %v142 = vadd.f32 %v140, %v141
        %v143 = vsel %vm139, %v137, 0.0
        %v144 = vadd.f32 %v142, %v143
        %v145 = vsel %vm139, %v138, 0.0
        %v146 = vadd.f32 %v144, %v145
        %v147 = vlaneseq
        %v148 = vand.u32 %v147, 127
        %v149 = vand.u32 %v148, 15
        %150 = vrot.lane.b32.xlu0 %v146, 16
        %v151 = vpop.permute.xlu0 %150
        %v153 = vrot.slane %v151, 7
        %vm155 = vcmask 1040384
        %v156 = vsel %vm155, 0.0, %v153
        %vm157 = vcmp.ge.s32.totalorder %v148, 16
        %v158 = vsel %vm157, %v151, %v156
        %159 = vrot.lane.b32.xlu0 %v146, 112
        %v160 = vpop.permute.xlu0 %159
        %v162 = vrot.slane %v160, 1
        %v164 = vsel %vm155, %v162, 0.0
        %vm165 = vcmp.lt.s32.totalorder %v148, 112
        %v166 = vsel %vm165, %v160, %v164
        %v167 = vmul.f32 %v146, 2.0
        %v168 = vadd.f32 %v158, %v167
        %v169 = vadd.f32 %v168, %v166
        %v170 = vsub.f32 %v158, %v166
        %vm171 = vcmp.eq.s32.totalorder %v149, 0
        %172 = vrot.lane.b32.xlu0 %v169, 1
        %v173 = vpop.permute.xlu0 %172
        %v174 = vsel %vm171, 0.0, %v173
        %vm175 = vcmp.eq.s32.totalorder %v149, 15
        %176 = vrot.lane.b32.xlu0 %v169, 127
        %v177 = vpop.permute.xlu0 %176
        %v178 = vsel %vm175, 0.0, %v177
        %v179 = vsub.f32 %v174, %v178
        %180 = vrot.lane.b32.xlu0 %v170, 1
        %v181 = vpop.permute.xlu0 %180
        %v182 = vsel %vm171, 0.0, %v181
        %v183 = vmul.f32 %v170, 2.0
        %v184 = vadd.f32 %v182, %v183
        %185 = vrot.lane.b32.xlu0 %v170, 127
        %v186 = vpop.permute.xlu0 %185
        %v187 = vsel %vm175, 0.0, %v186
        %v188 = vadd.f32 %v184, %v187
        %v189 = vmul.f32 %v179, %v179
        %v190 = vmul.f32 %v188, %v188
        %v191 = vadd.f32 %v189, %v190
        %vm192 = vcmp.lt.f32.partialorder %v191, 1.0
        %v193 = vsel %vm192, %v191, 0.0
        %v194 = vsel %vm139, %v193, 0.0
        %v195 = vrot.slane %v194, 4
        %v196 = vadd.f32 %v194, %v195
        %v197 = vrot.slane %v196, 2
        %v198 = vadd.f32 %v196, %v197
        %v199 = vrot.slane %v198, 1
        %v200 = vadd.f32 %v198, %v199
        %v201 = vsel %vm192, 1, 0
        %v202 = vcvt.s32.f32 %v201
        %v203 = vsel %vm139, %v202, 0.0
        %v204 = vrot.slane %v203, 4
        %v205 = vadd.f32 %v203, %v204
        %v206 = vrot.slane %v205, 2
        %v207 = vadd.f32 %v205, %v206
        %v208 = vrot.slane %v207, 1
        %v209 = vadd.f32 %v207, %v208
        %v210 = vsel %vm155, %v200, %v209
        %211 = vst [vmem:[%s134] sm:$0x3] %v210
        %s212 = sand.u32 %s52, 1
        %s213 = scalar_lea.sflag [#allocation4], %s212
        %s214 = sand.u32 %s52, 1
        %s215 = smul.addr %s214, 2
        %s216 = scalar_lea.vmem [#allocation5], %s215
        // Predicated region
        $region29: #{tpu_custom_call.1} parent=23 // pred_check
          %p217 = pneg %p62
        $region30: #{tpu_custom_call.1} parent=23 // pred_check_branch
          %219 = sbr.rel (%p217) target = $region32
        $region31: #{tpu_custom_call.1} parent=23 // pred_region
          %s221 = ssub.s32 32, 32
          %222 = vsyncadd %s213, %s221
          %s223 = smul.addr %s18, 32
          %s224 = scalar_lea.hbm %s1, %s223
          %s226 = sshll.u32 %s216, 4
          %s227 = int_to_ptr.vmem [resolvable:$true] %s226
          %229 = dma.vmem_to_hbm [thread:$0]  %s227, 32, %s224, %s213
        $region32: #{tpu_custom_call.1} parent=23 // pred_fallthru
          _
      $region24: #{tpu_custom_call.1} parent=5 // pred_fallthru
        _
      %p230 = scmp.le.s32.totalorder 2, %s13
      // Predicated region
      $region33: #{tpu_custom_call.1} parent=5 // pred_check
        %p231 = pneg %p230
      $region34: #{tpu_custom_call.1} parent=5 // pred_check_branch
        %233 = sbr.rel (%p231) target = $region36
      $region35: #{tpu_custom_call.1} parent=5 // pred_region
        %s234 = ssub.s32 %s13, 2
        // Predicated region
        $region37: #{tpu_custom_call.1} parent=35 // pred_check
          %p235 = pneg %p68
        $region38: #{tpu_custom_call.1} parent=35 // pred_check_branch
          %237 = sbr.rel (%p235) target = $region40
        $region39: #{tpu_custom_call.1} parent=35 // pred_region
          %s238 = sand.u32 %s53, 1
          %s239 = scalar_lea.sflag [#allocation4], %s238
          %s240 = sand.u32 %s53, 1
          %s241 = smul.addr %s240, 2
          %s242 = scalar_lea.vmem [#allocation5], %s241
          %243 = dma.done %s239, 32
        $region40: #{tpu_custom_call.1} parent=35 // pred_fallthru
          _
      $region36: #{tpu_custom_call.1} parent=5 // pred_fallthru
        _
    $region6: #{tpu_custom_call.1} parent=1 // loop_footer
      %s17 = sadd.s32 1, %s13
    $region7: #{tpu_custom_call.1} parent=1 // loop_footer_branch
      %12 = sbr.rel target = $region3
    $region8: #{tpu_custom_call.1} parent=1 // loop_exit
      _
    %244 = vsyncpa [#allocation3], 1
    %s245 = scalar_lea.sflag [#allocation3], 1
    %246 = vsyncpa %s245, 1
    %247 = vsyncpa [#allocation4], 1
    %s248 = scalar_lea.sflag [#allocation4], 1
    %249 = vsyncpa %s248, 1

</llo_original>
